<compile_context>
chip_gen: v7x
topology: tpu7x:2x2x1
jax: 0.10.0
libtpu: 0.0.40
codegen_flags: <defaults>
</compile_context>

<pallas_src>
import functools

import jax
import jax.numpy as jnp
from jax.experimental import pallas as pl
from jax.experimental.pallas import tpu as pltpu


def _arf_kernel(x_ref, w_ref, b_ref, o_ref, mem_ref, thr_ref, *,
                d_out, decay, inhibition_strength, base_threshold,
                threshold_decay, threshold_increase):
    ti = pl.program_id(1)

    # (Re-)initialize the recurrent carries at the start of each batch tile.
    @pl.when(ti == 0)
    def _():
        mem_ref[...] = jnp.zeros_like(mem_ref)
        thr_ref[...] = jnp.full(thr_ref.shape, base_threshold, thr_ref.dtype)

    bb, tb, d_in = x_ref.shape
    d_out_p = o_ref.shape[-1]

    # Input currents for the whole time block in one MXU matmul
    # (hoisted out of the recurrence — no dependence on mem/thr).
    x2d = x_ref[...].reshape(bb * tb, d_in)
    cur = jnp.dot(x2d, w_ref[...], preferred_element_type=jnp.float32) + b_ref[...]
    cur = cur.reshape(bb, tb, d_out_p)

    # Padded output lanes must not contribute to the inhibition sum.
    # Pre-scale by inhibition_strength so the loop body needs one fewer op.
    if d_out_p != d_out:
        lane = jax.lax.broadcasted_iota(jnp.int32, (bb, d_out_p), 1)
        inh_mask = jnp.where(lane < d_out, inhibition_strength, 0.0).astype(jnp.float32)
    else:
        inh_mask = None

    mem = mem_ref[...]
    thr = thr_ref[...]
    # Sequential part of the recurrence; tb is small & static -> full unroll.
    for ts in range(tb):
        c_t = cur[:, ts, :]
        if inh_mask is None:
            inhibition = inhibition_strength * jnp.sum(mem, axis=1, keepdims=True)
        else:
            inhibition = jnp.sum(mem * inh_mask, axis=1, keepdims=True)
        mem = decay * mem + (c_t - inhibition)
        spikes = (mem >= thr).astype(jnp.float32)
        mem = mem - spikes * thr                      # soft reset (simplified)
        thr = threshold_decay * thr + threshold_increase * spikes
        o_ref[:, ts, :] = spikes                      # lane-dense (d_out_p % 128 == 0)

    mem_ref[...] = mem
    thr_ref[...] = thr


def adaptive_resonate_and_fire(x, weight, bias, *,
                               threshold=1.0, decay=0.9, inhibition_strength=0.1,
                               threshold_decay=0.9, threshold_increase=0.1,
                               time_block=8, batch_block=None):
    """x: (batch, seq, input_size); weight: (output_size, input_size); bias: (output_size,)."""
    B, T, Din = x.shape
    Dout = weight.shape[0]

    assert time_block % 8 == 0, "time_block must be a multiple of 8 (sublane tiling)"
    bb = B if batch_block is None else batch_block
    assert B % bb == 0, "batch_block must divide batch"

    x = x.astype(jnp.float32)
    w_t = jnp.transpose(weight, (1, 0)).astype(jnp.float32)      # (Din, Dout) — tiny param
    b = bias.astype(jnp.float32)

    # Lane-dense output: pad feature dim to a multiple of 128.
    d_out_p = ((Dout + 127) // 128) * 128
    if d_out_p != Dout:
        w_t = jnp.pad(w_t, ((0, 0), (0, d_out_p - Dout)))
        b = jnp.pad(b, (0, d_out_p - Dout))
    b2d = b.reshape(1, d_out_p)

    # Pad the time axis to a multiple of the time block (sliced off below).
    tb = time_block
    t_pad = ((T + tb - 1) // tb) * tb
    if t_pad != T:
        x = jnp.pad(x, ((0, 0), (0, t_pad - T), (0, 0)))

    kernel = functools.partial(
        _arf_kernel,
        d_out=Dout,
        decay=float(decay),
        inhibition_strength=float(inhibition_strength),
        base_threshold=float(threshold),
        threshold_decay=float(threshold_decay),
        threshold_increase=float(threshold_increase),
    )

    out = pl.pallas_call(
        kernel,
        out_shape=jax.ShapeDtypeStruct((B, t_pad, d_out_p), jnp.float32),
        grid_spec=pltpu.PrefetchScalarGridSpec(
            num_scalar_prefetch=0,
            grid=(B // bb, t_pad // tb),
            in_specs=[
                pl.BlockSpec((bb, tb, Din), lambda bi, ti: (bi, ti, 0)),   # x time-block
                pl.BlockSpec((Din, d_out_p), lambda bi, ti: (0, 0)),       # weight (resident)
                pl.BlockSpec((1, d_out_p), lambda bi, ti: (0, 0)),         # bias   (resident)
            ],
            out_specs=pl.BlockSpec((bb, tb, d_out_p), lambda bi, ti: (bi, ti, 0)),
            scratch_shapes=[
                pltpu.VMEM((bb, d_out_p), jnp.float32),   # membrane potential carry
                pltpu.VMEM((bb, d_out_p), jnp.float32),   # adaptive threshold carry
            ],
        ),
        compiler_params=pltpu.CompilerParams(
            dimension_semantics=("parallel", "arbitrary"),   # batch || , time sequential
            vmem_limit_bytes=32 * 1024 * 1024,
        ),
    )(x, w_t, b2d)

    if t_pad != T or d_out_p != Dout:
        out = out[:, :T, :Dout]
    return out


def _reference(x, weight, bias, *, threshold=1.0, decay=0.9,
               inhibition_strength=0.1, threshold_decay=0.9,
               threshold_increase=0.1):
    """Pure-JAX reference mirroring the PyTorch forward."""
    B, T, _ = x.shape
    Dout = weight.shape[0]
    mem = jnp.zeros((B, Dout), jnp.float32)
    thr = jnp.full((B, Dout), threshold, jnp.float32)
    outs = []
    for t in range(T):
        cur = x[:, t, :] @ weight.T + bias
        cur = cur - inhibition_strength * jnp.sum(mem, axis=1, keepdims=True)
        mem = decay * mem + cur
        spikes = (mem >= thr).astype(jnp.float32)
        mem = mem * (1.0 - spikes) + spikes * (mem - thr)
        thr = threshold_decay * thr + threshold_increase * spikes
        outs.append(spikes[:, None, :])
    return jnp.concatenate(outs, axis=1)


if __name__ == "__main__":
    B, T, Din, Dout = 2, 16, 32, 32

    key = jax.random.PRNGKey(0)
    kx, kw, kb = jax.random.split(key, 3)

    # Deterministic parameter init (nn.Linear-style uniform bounds).
    bound = 1.0 / (Din ** 0.5)
    weight = jax.random.uniform(kw, (Dout, Din), jnp.float32, -bound, bound)
    bias = jax.random.uniform(kb, (Dout,), jnp.float32, -bound, bound)
    x = jax.random.normal(kx, (B, T, Din), jnp.float32)

    out = adaptive_resonate_and_fire(x, weight, bias, time_block=8)
    out = jax.block_until_ready(out)

    ref = _reference(x, weight, bias)
    assert out.shape == (B, T, Dout)
    assert jnp.allclose(out, ref, atol=1e-5), "mismatch vs pure-JAX reference"

    print("KERNEL_OK")
</pallas_src>

<mosaic_0001>
module attributes {stable_mosaic.version = 11 : i64} {
  func.func @_arf_kernel(%arg0: i32, %arg1: i32, %arg2: memref<2x8x32xf32, #tpu.memory_space<vmem>>, %arg3: memref<32x128xf32, #tpu.memory_space<vmem>>, %arg4: memref<1x128xf32, #tpu.memory_space<vmem>>, %arg5: memref<2x8x128xf32, #tpu.memory_space<vmem>>, %arg6: memref<2x128xf32, #tpu.memory_space<vmem>>, %arg7: memref<2x128xf32, #tpu.memory_space<vmem>>) attributes {dimension_semantics = [#tpu.dimension_semantics<parallel>, #tpu.dimension_semantics<arbitrary>], iteration_bounds = array<i64: 1, 2>, scalar_prefetch = 0 : i64, scratch_operands = 2 : i64, tpu.core_type = #tpu.core_type<tc>, window_params = [{transform_indices = @transform_0, window_bounds = array<i64: 2, 8, 32>}, {pipeline_mode = #tpu.pipeline_mode<synchronous>, transform_indices = @transform_1, window_bounds = array<i64: 32, 128>}, {pipeline_mode = #tpu.pipeline_mode<synchronous>, transform_indices = @transform_2, window_bounds = array<i64: 1, 128>}, {transform_indices = @transform_3, window_bounds = array<i64: 2, 8, 128>}]} {
    %c0_i32 = arith.constant 0 : i32
    %0 = arith.cmpi eq, %arg1, %c0_i32 : i32
    %1 = arith.extui %0 : i1 to i32
    %c0_i32_0 = arith.constant 0 : i32
    %2 = arith.cmpi ne, %1, %c0_i32_0 : i32
    scf.if %2 {
      %cst_66 = arith.constant 0.000000e+00 : f32
      %205 = vector.broadcast %cst_66 : f32 to vector<2x128xf32>
      %c0_67 = arith.constant 0 : index
      %c0_68 = arith.constant 0 : index
      %206 = vector.load %arg6[%c0_67, %c0_68] : memref<2x128xf32, #tpu.memory_space<vmem>>, vector<2x128xf32>
      tpu.vector_store %arg6[%c0_67, %c0_68], %205 {strides = array<i32>} : memref<2x128xf32, #tpu.memory_space<vmem>>, vector<2x128xf32>,
      %cst_69 = arith.constant 1.000000e+00 : f32
      %207 = vector.broadcast %cst_69 : f32 to vector<2x128xf32>
      %c0_70 = arith.constant 0 : index
      %c0_71 = arith.constant 0 : index
      %208 = vector.load %arg7[%c0_70, %c0_71] : memref<2x128xf32, #tpu.memory_space<vmem>>, vector<2x128xf32>
      tpu.vector_store %arg7[%c0_70, %c0_71], %207 {strides = array<i32>} : memref<2x128xf32, #tpu.memory_space<vmem>>, vector<2x128xf32>,
    } else {
    }
    %c0 = arith.constant 0 : index
    %c0_1 = arith.constant 0 : index
    %c0_2 = arith.constant 0 : index
    %3 = vector.load %arg2[%c0, %c0_1, %c0_2] : memref<2x8x32xf32, #tpu.memory_space<vmem>>, vector<2x8x32xf32>
    %4 = vector.shape_cast %3 : vector<2x8x32xf32> to vector<16x32xf32>
    %c0_3 = arith.constant 0 : index
    %c0_4 = arith.constant 0 : index
    %5 = vector.load %arg3[%c0_3, %c0_4] : memref<32x128xf32, #tpu.memory_space<vmem>>, vector<32x128xf32>
    %cst = arith.constant dense<0.000000e+00> : vector<16x128xf32>
    %6 = tpu.matmul %4, %5, %cst {dimension_numbers = #tpu.dot_dimension_numbers<[1], [0], [0], [1], [0, 0, 1, 1], [], []>} : vector<16x32xf32>, vector<32x128xf32>, vector<16x128xf32> -> vector<16x128xf32>
    %c0_5 = arith.constant 0 : index
    %c0_6 = arith.constant 0 : index
    %7 = vector.load %arg4[%c0_5, %c0_6] : memref<1x128xf32, #tpu.memory_space<vmem>>, vector<1x128xf32>
    %8 = vector.broadcast %7 : vector<1x128xf32> to vector<16x128xf32>
    %9 = arith.addf %6, %8 : vector<16x128xf32>
    %10 = vector.shape_cast %9 : vector<16x128xf32> to vector<2x8x128xf32>
    %11 = tpu.iota {dimensions = array<i32: 1>} : vector<2x128xi32>
    %c32_i32 = arith.constant 32 : i32
    %12 = vector.broadcast %c32_i32 : i32 to vector<2x128xi32>
    %13 = arith.cmpi slt, %11, %12 : vector<2x128xi32>
    %cst_7 = arith.constant 1.000000e-01 : f32
    %cst_8 = arith.constant 0.000000e+00 : f32
    %14 = vector.broadcast %cst_7 : f32 to vector<2x128xf32>
    %15 = vector.broadcast %cst_8 : f32 to vector<2x128xf32>
    %16 = arith.select %13, %14, %15 : vector<2x128xi1>, vector<2x128xf32>
    %c0_9 = arith.constant 0 : index
    %c0_10 = arith.constant 0 : index
    %17 = vector.load %arg6[%c0_9, %c0_10] : memref<2x128xf32, #tpu.memory_space<vmem>>, vector<2x128xf32>
    %c0_11 = arith.constant 0 : index
    %c0_12 = arith.constant 0 : index
    %18 = vector.load %arg7[%c0_11, %c0_12] : memref<2x128xf32, #tpu.memory_space<vmem>>, vector<2x128xf32>
    %19 = vector.extract_strided_slice %10 {offsets = [0, 0, 0], sizes = [2, 1, 128], strides = [1, 1, 1]} : vector<2x8x128xf32> to vector<2x1x128xf32>
    %20 = vector.shape_cast %19 : vector<2x1x128xf32> to vector<2x128xf32>
    %21 = arith.mulf %17, %16 : vector<2x128xf32>
    %cst_13 = arith.constant dense<0.000000e+00> : vector<2xf32>
    %22 = vector.multi_reduction <add>, %21, %cst_13 [1] : vector<2x128xf32> to vector<2xf32>
    %23 = vector.shape_cast %22 : vector<2xf32> to vector<2x1xf32>
    %cst_14 = arith.constant 0.899999976 : f32
    %24 = vector.broadcast %cst_14 : f32 to vector<2x128xf32>
    %25 = arith.mulf %24, %17 : vector<2x128xf32>
    %26 = vector.broadcast %23 : vector<2x1xf32> to vector<2x128xf32>
    %27 = arith.subf %20, %26 : vector<2x128xf32>
    %28 = arith.addf %25, %27 : vector<2x128xf32>
    %29 = arith.cmpf oge, %28, %18 : vector<2x128xf32>
    %30 = arith.extui %29 : vector<2x128xi1> to vector<2x128xi32>
    %31 = arith.sitofp %30 : vector<2x128xi32> to vector<2x128xf32>
    %32 = arith.mulf %31, %18 : vector<2x128xf32>
    %33 = arith.subf %28, %32 : vector<2x128xf32>
    %cst_15 = arith.constant 0.899999976 : f32
    %34 = vector.broadcast %cst_15 : f32 to vector<2x128xf32>
    %35 = arith.mulf %34, %18 : vector<2x128xf32>
    %cst_16 = arith.constant 1.000000e-01 : f32
    %36 = vector.broadcast %cst_16 : f32 to vector<2x128xf32>
    %37 = arith.mulf %36, %31 : vector<2x128xf32>
    %38 = arith.addf %35, %37 : vector<2x128xf32>
    %c0_17 = arith.constant 0 : index
    %c0_18 = arith.constant 0 : index
    %c0_19 = arith.constant 0 : index
    %39 = vector.load %arg5[%c0_17, %c0_18, %c0_19] : memref<2x8x128xf32, #tpu.memory_space<vmem>>, vector<2x1x128xf32>
    %40 = vector.shape_cast %39 : vector<2x1x128xf32> to vector<2x128xf32>
    %41 = vector.shape_cast %31 : vector<2x128xf32> to vector<2x1x128xf32>
    tpu.vector_store %arg5[%c0_17, %c0_18, %c0_19], %41 {strides = array<i32>} : memref<2x8x128xf32, #tpu.memory_space<vmem>>, vector<2x1x128xf32>,
    %42 = vector.extract_strided_slice %10 {offsets = [0, 1, 0], sizes = [2, 1, 128], strides = [1, 1, 1]} : vector<2x8x128xf32> to vector<2x1x128xf32>
    %43 = vector.shape_cast %42 : vector<2x1x128xf32> to vector<2x128xf32>
    %44 = arith.mulf %33, %16 : vector<2x128xf32>
    %cst_20 = arith.constant dense<0.000000e+00> : vector<2xf32>
    %45 = vector.multi_reduction <add>, %44, %cst_20 [1] : vector<2x128xf32> to vector<2xf32>
    %46 = vector.shape_cast %45 : vector<2xf32> to vector<2x1xf32>
    %cst_21 = arith.constant 0.899999976 : f32
    %47 = vector.broadcast %cst_21 : f32 to vector<2x128xf32>
    %48 = arith.mulf %47, %33 : vector<2x128xf32>
    %49 = vector.broadcast %46 : vector<2x1xf32> to vector<2x128xf32>
    %50 = arith.subf %43, %49 : vector<2x128xf32>
    %51 = arith.addf %48, %50 : vector<2x128xf32>
    %52 = arith.cmpf oge, %51, %38 : vector<2x128xf32>
    %53 = arith.extui %52 : vector<2x128xi1> to vector<2x128xi32>
    %54 = arith.sitofp %53 : vector<2x128xi32> to vector<2x128xf32>
    %55 = arith.mulf %54, %38 : vector<2x128xf32>
    %56 = arith.subf %51, %55 : vector<2x128xf32>
    %cst_22 = arith.constant 0.899999976 : f32
    %57 = vector.broadcast %cst_22 : f32 to vector<2x128xf32>
    %58 = arith.mulf %57, %38 : vector<2x128xf32>
    %cst_23 = arith.constant 1.000000e-01 : f32
    %59 = vector.broadcast %cst_23 : f32 to vector<2x128xf32>
    %60 = arith.mulf %59, %54 : vector<2x128xf32>
    %61 = arith.addf %58, %60 : vector<2x128xf32>
    %c0_24 = arith.constant 0 : index
    %c1 = arith.constant 1 : index
    %c0_25 = arith.constant 0 : index
    %62 = vector.load %arg5[%c0_24, %c1, %c0_25] : memref<2x8x128xf32, #tpu.memory_space<vmem>>, vector<2x1x128xf32>
    %63 = vector.shape_cast %62 : vector<2x1x128xf32> to vector<2x128xf32>
    %64 = vector.shape_cast %54 : vector<2x128xf32> to vector<2x1x128xf32>
    tpu.vector_store %arg5[%c0_24, %c1, %c0_25], %64 {strides = array<i32>} : memref<2x8x128xf32, #tpu.memory_space<vmem>>, vector<2x1x128xf32>,
    %65 = vector.extract_strided_slice %10 {offsets = [0, 2, 0], sizes = [2, 1, 128], strides = [1, 1, 1]} : vector<2x8x128xf32> to vector<2x1x128xf32>
    %66 = vector.shape_cast %65 : vector<2x1x128xf32> to vector<2x128xf32>
    %67 = arith.mulf %56, %16 : vector<2x128xf32>
    %cst_26 = arith.constant dense<0.000000e+00> : vector<2xf32>
    %68 = vector.multi_reduction <add>, %67, %cst_26 [1] : vector<2x128xf32> to vector<2xf32>
    %69 = vector.shape_cast %68 : vector<2xf32> to vector<2x1xf32>
    %cst_27 = arith.constant 0.899999976 : f32
    %70 = vector.broadcast %cst_27 : f32 to vector<2x128xf32>
    %71 = arith.mulf %70, %56 : vector<2x128xf32>
    %72 = vector.broadcast %69 : vector<2x1xf32> to vector<2x128xf32>
    %73 = arith.subf %66, %72 : vector<2x128xf32>
    %74 = arith.addf %71, %73 : vector<2x128xf32>
    %75 = arith.cmpf oge, %74, %61 : vector<2x128xf32>
    %76 = arith.extui %75 : vector<2x128xi1> to vector<2x128xi32>
    %77 = arith.sitofp %76 : vector<2x128xi32> to vector<2x128xf32>
    %78 = arith.mulf %77, %61 : vector<2x128xf32>
    %79 = arith.subf %74, %78 : vector<2x128xf32>
    %cst_28 = arith.constant 0.899999976 : f32
    %80 = vector.broadcast %cst_28 : f32 to vector<2x128xf32>
    %81 = arith.mulf %80, %61 : vector<2x128xf32>
    %cst_29 = arith.constant 1.000000e-01 : f32
    %82 = vector.broadcast %cst_29 : f32 to vector<2x128xf32>
    %83 = arith.mulf %82, %77 : vector<2x128xf32>
    %84 = arith.addf %81, %83 : vector<2x128xf32>
    %c0_30 = arith.constant 0 : index
    %c2 = arith.constant 2 : index
    %c0_31 = arith.constant 0 : index
    %85 = vector.load %arg5[%c0_30, %c2, %c0_31] : memref<2x8x128xf32, #tpu.memory_space<vmem>>, vector<2x1x128xf32>
    %86 = vector.shape_cast %85 : vector<2x1x128xf32> to vector<2x128xf32>
    %87 = vector.shape_cast %77 : vector<2x128xf32> to vector<2x1x128xf32>
    tpu.vector_store %arg5[%c0_30, %c2, %c0_31], %87 {strides = array<i32>} : memref<2x8x128xf32, #tpu.memory_space<vmem>>, vector<2x1x128xf32>,
    %88 = vector.extract_strided_slice %10 {offsets = [0, 3, 0], sizes = [2, 1, 128], strides = [1, 1, 1]} : vector<2x8x128xf32> to vector<2x1x128xf32>
    %89 = vector.shape_cast %88 : vector<2x1x128xf32> to vector<2x128xf32>
    %90 = arith.mulf %79, %16 : vector<2x128xf32>
    %cst_32 = arith.constant dense<0.000000e+00> : vector<2xf32>
    %91 = vector.multi_reduction <add>, %90, %cst_32 [1] : vector<2x128xf32> to vector<2xf32>
    %92 = vector.shape_cast %91 : vector<2xf32> to vector<2x1xf32>
    %cst_33 = arith.constant 0.899999976 : f32
    %93 = vector.broadcast %cst_33 : f32 to vector<2x128xf32>
    %94 = arith.mulf %93, %79 : vector<2x128xf32>
    %95 = vector.broadcast %92 : vector<2x1xf32> to vector<2x128xf32>
    %96 = arith.subf %89, %95 : vector<2x128xf32>
    %97 = arith.addf %94, %96 : vector<2x128xf32>
    %98 = arith.cmpf oge, %97, %84 : vector<2x128xf32>
    %99 = arith.extui %98 : vector<2x128xi1> to vector<2x128xi32>
    %100 = arith.sitofp %99 : vector<2x128xi32> to vector<2x128xf32>
    %101 = arith.mulf %100, %84 : vector<2x128xf32>
    %102 = arith.subf %97, %101 : vector<2x128xf32>
    %cst_34 = arith.constant 0.899999976 : f32
    %103 = vector.broadcast %cst_34 : f32 to vector<2x128xf32>
    %104 = arith.mulf %103, %84 : vector<2x128xf32>
    %cst_35 = arith.constant 1.000000e-01 : f32
    %105 = vector.broadcast %cst_35 : f32 to vector<2x128xf32>
    %106 = arith.mulf %105, %100 : vector<2x128xf32>
    %107 = arith.addf %104, %106 : vector<2x128xf32>
    %c0_36 = arith.constant 0 : index
    %c3 = arith.constant 3 : index
    %c0_37 = arith.constant 0 : index
    %108 = vector.load %arg5[%c0_36, %c3, %c0_37] : memref<2x8x128xf32, #tpu.memory_space<vmem>>, vector<2x1x128xf32>
    %109 = vector.shape_cast %108 : vector<2x1x128xf32> to vector<2x128xf32>
    %110 = vector.shape_cast %100 : vector<2x128xf32> to vector<2x1x128xf32>
    tpu.vector_store %arg5[%c0_36, %c3, %c0_37], %110 {strides = array<i32>} : memref<2x8x128xf32, #tpu.memory_space<vmem>>, vector<2x1x128xf32>,
    %111 = vector.extract_strided_slice %10 {offsets = [0, 4, 0], sizes = [2, 1, 128], strides = [1, 1, 1]} : vector<2x8x128xf32> to vector<2x1x128xf32>
    %112 = vector.shape_cast %111 : vector<2x1x128xf32> to vector<2x128xf32>
    %113 = arith.mulf %102, %16 : vector<2x128xf32>
    %cst_38 = arith.constant dense<0.000000e+00> : vector<2xf32>
    %114 = vector.multi_reduction <add>, %113, %cst_38 [1] : vector<2x128xf32> to vector<2xf32>
    %115 = vector.shape_cast %114 : vector<2xf32> to vector<2x1xf32>
    %cst_39 = arith.constant 0.899999976 : f32
    %116 = vector.broadcast %cst_39 : f32 to vector<2x128xf32>
    %117 = arith.mulf %116, %102 : vector<2x128xf32>
    %118 = vector.broadcast %115 : vector<2x1xf32> to vector<2x128xf32>
    %119 = arith.subf %112, %118 : vector<2x128xf32>
    %120 = arith.addf %117, %119 : vector<2x128xf32>
    %121 = arith.cmpf oge, %120, %107 : vector<2x128xf32>
    %122 = arith.extui %121 : vector<2x128xi1> to vector<2x128xi32>
    %123 = arith.sitofp %122 : vector<2x128xi32> to vector<2x128xf32>
    %124 = arith.mulf %123, %107 : vector<2x128xf32>
    %125 = arith.subf %120, %124 : vector<2x128xf32>
    %cst_40 = arith.constant 0.899999976 : f32
    %126 = vector.broadcast %cst_40 : f32 to vector<2x128xf32>
    %127 = arith.mulf %126, %107 : vector<2x128xf32>
    %cst_41 = arith.constant 1.000000e-01 : f32
    %128 = vector.broadcast %cst_41 : f32 to vector<2x128xf32>
    %129 = arith.mulf %128, %123 : vector<2x128xf32>
    %130 = arith.addf %127, %129 : vector<2x128xf32>
    %c0_42 = arith.constant 0 : index
    %c4 = arith.constant 4 : index
    %c0_43 = arith.constant 0 : index
    %131 = vector.load %arg5[%c0_42, %c4, %c0_43] : memref<2x8x128xf32, #tpu.memory_space<vmem>>, vector<2x1x128xf32>
    %132 = vector.shape_cast %131 : vector<2x1x128xf32> to vector<2x128xf32>
    %133 = vector.shape_cast %123 : vector<2x128xf32> to vector<2x1x128xf32>
    tpu.vector_store %arg5[%c0_42, %c4, %c0_43], %133 {strides = array<i32>} : memref<2x8x128xf32, #tpu.memory_space<vmem>>, vector<2x1x128xf32>,
    %134 = vector.extract_strided_slice %10 {offsets = [0, 5, 0], sizes = [2, 1, 128], strides = [1, 1, 1]} : vector<2x8x128xf32> to vector<2x1x128xf32>
    %135 = vector.shape_cast %134 : vector<2x1x128xf32> to vector<2x128xf32>
    %136 = arith.mulf %125, %16 : vector<2x128xf32>
    %cst_44 = arith.constant dense<0.000000e+00> : vector<2xf32>
    %137 = vector.multi_reduction <add>, %136, %cst_44 [1] : vector<2x128xf32> to vector<2xf32>
    %138 = vector.shape_cast %137 : vector<2xf32> to vector<2x1xf32>
    %cst_45 = arith.constant 0.899999976 : f32
    %139 = vector.broadcast %cst_45 : f32 to vector<2x128xf32>
    %140 = arith.mulf %139, %125 : vector<2x128xf32>
    %141 = vector.broadcast %138 : vector<2x1xf32> to vector<2x128xf32>
    %142 = arith.subf %135, %141 : vector<2x128xf32>
    %143 = arith.addf %140, %142 : vector<2x128xf32>
    %144 = arith.cmpf oge, %143, %130 : vector<2x128xf32>
    %145 = arith.extui %144 : vector<2x128xi1> to vector<2x128xi32>
    %146 = arith.sitofp %145 : vector<2x128xi32> to vector<2x128xf32>
    %147 = arith.mulf %146, %130 : vector<2x128xf32>
    %148 = arith.subf %143, %147 : vector<2x128xf32>
    %cst_46 = arith.constant 0.899999976 : f32
    %149 = vector.broadcast %cst_46 : f32 to vector<2x128xf32>
    %150 = arith.mulf %149, %130 : vector<2x128xf32>
    %cst_47 = arith.constant 1.000000e-01 : f32
    %151 = vector.broadcast %cst_47 : f32 to vector<2x128xf32>
    %152 = arith.mulf %151, %146 : vector<2x128xf32>
    %153 = arith.addf %150, %152 : vector<2x128xf32>
    %c0_48 = arith.constant 0 : index
    %c5 = arith.constant 5 : index
    %c0_49 = arith.constant 0 : index
    %154 = vector.load %arg5[%c0_48, %c5, %c0_49] : memref<2x8x128xf32, #tpu.memory_space<vmem>>, vector<2x1x128xf32>
    %155 = vector.shape_cast %154 : vector<2x1x128xf32> to vector<2x128xf32>
    %156 = vector.shape_cast %146 : vector<2x128xf32> to vector<2x1x128xf32>
    tpu.vector_store %arg5[%c0_48, %c5, %c0_49], %156 {strides = array<i32>} : memref<2x8x128xf32, #tpu.memory_space<vmem>>, vector<2x1x128xf32>,
    %157 = vector.extract_strided_slice %10 {offsets = [0, 6, 0], sizes = [2, 1, 128], strides = [1, 1, 1]} : vector<2x8x128xf32> to vector<2x1x128xf32>
    %158 = vector.shape_cast %157 : vector<2x1x128xf32> to vector<2x128xf32>
    %159 = arith.mulf %148, %16 : vector<2x128xf32>
    %cst_50 = arith.constant dense<0.000000e+00> : vector<2xf32>
    %160 = vector.multi_reduction <add>, %159, %cst_50 [1] : vector<2x128xf32> to vector<2xf32>
    %161 = vector.shape_cast %160 : vector<2xf32> to vector<2x1xf32>
    %cst_51 = arith.constant 0.899999976 : f32
    %162 = vector.broadcast %cst_51 : f32 to vector<2x128xf32>
    %163 = arith.mulf %162, %148 : vector<2x128xf32>
    %164 = vector.broadcast %161 : vector<2x1xf32> to vector<2x128xf32>
    %165 = arith.subf %158, %164 : vector<2x128xf32>
    %166 = arith.addf %163, %165 : vector<2x128xf32>
    %167 = arith.cmpf oge, %166, %153 : vector<2x128xf32>
    %168 = arith.extui %167 : vector<2x128xi1> to vector<2x128xi32>
    %169 = arith.sitofp %168 : vector<2x128xi32> to vector<2x128xf32>
    %170 = arith.mulf %169, %153 : vector<2x128xf32>
    %171 = arith.subf %166, %170 : vector<2x128xf32>
    %cst_52 = arith.constant 0.899999976 : f32
    %172 = vector.broadcast %cst_52 : f32 to vector<2x128xf32>
    %173 = arith.mulf %172, %153 : vector<2x128xf32>
    %cst_53 = arith.constant 1.000000e-01 : f32
    %174 = vector.broadcast %cst_53 : f32 to vector<2x128xf32>
    %175 = arith.mulf %174, %169 : vector<2x128xf32>
    %176 = arith.addf %173, %175 : vector<2x128xf32>
    %c0_54 = arith.constant 0 : index
    %c6 = arith.constant 6 : index
    %c0_55 = arith.constant 0 : index
    %177 = vector.load %arg5[%c0_54, %c6, %c0_55] : memref<2x8x128xf32, #tpu.memory_space<vmem>>, vector<2x1x128xf32>
    %178 = vector.shape_cast %177 : vector<2x1x128xf32> to vector<2x128xf32>
    %179 = vector.shape_cast %169 : vector<2x128xf32> to vector<2x1x128xf32>
    tpu.vector_store %arg5[%c0_54, %c6, %c0_55], %179 {strides = array<i32>} : memref<2x8x128xf32, #tpu.memory_space<vmem>>, vector<2x1x128xf32>,
    %180 = vector.extract_strided_slice %10 {offsets = [0, 7, 0], sizes = [2, 1, 128], strides = [1, 1, 1]} : vector<2x8x128xf32> to vector<2x1x128xf32>
    %181 = vector.shape_cast %180 : vector<2x1x128xf32> to vector<2x128xf32>
    %182 = arith.mulf %171, %16 : vector<2x128xf32>
    %cst_56 = arith.constant dense<0.000000e+00> : vector<2xf32>
    %183 = vector.multi_reduction <add>, %182, %cst_56 [1] : vector<2x128xf32> to vector<2xf32>
    %184 = vector.shape_cast %183 : vector<2xf32> to vector<2x1xf32>
    %cst_57 = arith.constant 0.899999976 : f32
    %185 = vector.broadcast %cst_57 : f32 to vector<2x128xf32>
    %186 = arith.mulf %185, %171 : vector<2x128xf32>
    %187 = vector.broadcast %184 : vector<2x1xf32> to vector<2x128xf32>
    %188 = arith.subf %181, %187 : vector<2x128xf32>
    %189 = arith.addf %186, %188 : vector<2x128xf32>
    %190 = arith.cmpf oge, %189, %176 : vector<2x128xf32>
    %191 = arith.extui %190 : vector<2x128xi1> to vector<2x128xi32>
    %192 = arith.sitofp %191 : vector<2x128xi32> to vector<2x128xf32>
    %193 = arith.mulf %192, %176 : vector<2x128xf32>
    %194 = arith.subf %189, %193 : vector<2x128xf32>
    %cst_58 = arith.constant 0.899999976 : f32
    %195 = vector.broadcast %cst_58 : f32 to vector<2x128xf32>
    %196 = arith.mulf %195, %176 : vector<2x128xf32>
    %cst_59 = arith.constant 1.000000e-01 : f32
    %197 = vector.broadcast %cst_59 : f32 to vector<2x128xf32>
    %198 = arith.mulf %197, %192 : vector<2x128xf32>
    %199 = arith.addf %196, %198 : vector<2x128xf32>
    %c0_60 = arith.constant 0 : index
    %c7 = arith.constant 7 : index
    %c0_61 = arith.constant 0 : index
    %200 = vector.load %arg5[%c0_60, %c7, %c0_61] : memref<2x8x128xf32, #tpu.memory_space<vmem>>, vector<2x1x128xf32>
    %201 = vector.shape_cast %200 : vector<2x1x128xf32> to vector<2x128xf32>
    %202 = vector.shape_cast %192 : vector<2x128xf32> to vector<2x1x128xf32>
    tpu.vector_store %arg5[%c0_60, %c7, %c0_61], %202 {strides = array<i32>} : memref<2x8x128xf32, #tpu.memory_space<vmem>>, vector<2x1x128xf32>,
    %c0_62 = arith.constant 0 : index
    %c0_63 = arith.constant 0 : index
    %203 = vector.load %arg6[%c0_62, %c0_63] : memref<2x128xf32, #tpu.memory_space<vmem>>, vector<2x128xf32>
    tpu.vector_store %arg6[%c0_62, %c0_63], %194 {strides = array<i32>} : memref<2x128xf32, #tpu.memory_space<vmem>>, vector<2x128xf32>,
    %c0_64 = arith.constant 0 : index
    %c0_65 = arith.constant 0 : index
    %204 = vector.load %arg7[%c0_64, %c0_65] : memref<2x128xf32, #tpu.memory_space<vmem>>, vector<2x128xf32>
    tpu.vector_store %arg7[%c0_64, %c0_65], %199 {strides = array<i32>} : memref<2x128xf32, #tpu.memory_space<vmem>>, vector<2x128xf32>,
    return
  }
  func.func @transform_0(%arg0: i32, %arg1: i32) -> (i32, i32, i32) {
    %c0_i32 = arith.constant 0 : i32
    %c0_i32_0 = arith.constant 0 : i32
    return %arg0, %arg1, %c0_i32 : i32, i32, i32
  }
  func.func @transform_1(%arg0: i32, %arg1: i32) -> (i32, i32) {
    %c0_i32 = arith.constant 0 : i32
    %c0_i32_0 = arith.constant 0 : i32
    %c0_i32_1 = arith.constant 0 : i32
    return %c0_i32, %c0_i32_0 : i32, i32
  }
  func.func @transform_2(%arg0: i32, %arg1: i32) -> (i32, i32) {
    %c0_i32 = arith.constant 0 : i32
    %c0_i32_0 = arith.constant 0 : i32
    %c0_i32_1 = arith.constant 0 : i32
    return %c0_i32, %c0_i32_0 : i32, i32
  }
  func.func @transform_3(%arg0: i32, %arg1: i32) -> (i32, i32, i32) {
    %c0_i32 = arith.constant 0 : i32
    %c0_i32_0 = arith.constant 0 : i32
    return %arg0, %arg1, %c0_i32 : i32, i32, i32
  }
}

</mosaic_0001>

<llo_original>
// kernel: tpu_custom_call.1
$region0: #{tpu_custom_call.1}
  #allocation0 [shape = 'u32[]', space=smem, size = 0x4, offset = 0x4, fixed_abs, tag = 'smem constant byte address 0x4 - core index']
  #allocation1 [shape = 'u32[144,128]{1,0:T(1,128)}', space=vmem, size = 0x12000, scoped, tag = 'internal scratch']
  #allocation2 [shape = 'f32[2,128]{1,0:T(2,128)}', space=vmem, size = 0x400, scoped, tag = 'scratch operand']
  #allocation3 [shape = 'f32[2,128]{1,0:T(2,128)}', space=vmem, size = 0x400, scoped, tag = 'scratch operand']
  %s0 = inlined_call_operand.hbm [shape: f32[2,16,32], index: 0, kind: input, shape index: {}]
  %s1 = inlined_call_operand.hbm [shape: f32[32,128], index: 1, kind: input, shape index: {}]
  %s2 = inlined_call_operand.vmem [shape: f32[1,128], index: 2, kind: input, shape index: {}]
  %s3 = inlined_call_operand.hbm [shape: f32[2,16,128], index: 3, kind: output, shape index: {}]
  %s4 = sld [smem:[#allocation0]]
  $region57: #{tpu_custom_call.1} parent=0
    _
  %s6 = ssub.s32 1, %s4
  %s7 = scalar_select 0, %s6, %s4
  $region1: #{tpu_custom_call.1} parent=0
    #allocation4 [shape = 'u8[16384]{0}', space=vmem, size = 0x4000, scoped, tag = 'input window, operand 0']
    #allocation5 [shape = 's32[2]{0}', space=sflag, size = 0x8, scoped, tag = 'scoped memory for tpu_custom_call.1']
    #allocation6 [shape = 's32[2]{0}', space=sflag, size = 0x8, scoped, tag = 'scoped memory for tpu_custom_call.1']
    #allocation7 [shape = 'u8[16384]{0}', space=vmem, size = 0x4000, scoped, tag = 'input window, operand 1, single buffered']
    #allocation8 [shape = 's32[1]{0}', space=sflag, size = 0x4, scoped, tag = 'scoped memory for tpu_custom_call.1']
    #allocation9 [shape = 'u8[16384]{0}', space=vmem, size = 0x4000, scoped, tag = 'output window, operand 0']
    %8 = vsyncpa [#allocation5], 0
    %s9 = scalar_lea.sflag [#allocation5], 1
    %10 = vsyncpa %s9, 0
    %11 = vsyncpa [#allocation8], 0
    %12 = vsyncpa [#allocation6], 0
    %s13 = scalar_lea.sflag [#allocation6], 1
    %14 = vsyncpa %s13, 0
    loop: start=0, step=1, limit=4
    $region2: #{tpu_custom_call.1} parent=1 // loop_pre_header
      _
    $region3: #{tpu_custom_call.1} parent=1 // loop_header
      %s16 = sphi 0, %s20
      %p17 = scmp.ge.s32.totalorder %s16, 4
      %s23 = sphi 0, %s35
      %s24 = sphi 0, %s31
      %s25 = sphi 0, %s23
      %s26 = sphi 0, %s24
      %s27 = sphi 0, %s25
      %s28 = sphi 0, %s26
      %s40 = sphi 0, %s42
      %s43 = sphi 0, %s40
      %s44 = sphi 0, %s43
      %s60 = sphi 0, %s44
      %s64 = sphi 0, %s64
      %s66 = sphi 0, %s64
      %s67 = sphi 0, %s66
      %s81 = sphi 0, %s67
      %s85 = sphi 0, %s85
      %s87 = sphi 0, %s85
      %s88 = sphi 0, %s87
      %s102 = sphi 0, %s88
      %s110 = sphi 0, %s112
      %s113 = sphi 0, %s110
      %s114 = sphi 0, %s113
      %s130 = sphi 0, %s114
    $region4: #{tpu_custom_call.1} parent=1 // loop_header_branch
      %19 = sbr.rel (%p17) target = $region8
    $region5: #{tpu_custom_call.1} parent=1 // loop_body
      %s21 = ssub.s32 %s16, 1
      %s22 = ssub.s32 %s16, 2
      %s29 = sadd.s32 1, %s24
      %p30 = scmp.ge.s32.totalorder %s29, 2
      %s31 = scalar_select %p30, 0, %s29
      %s32 = sadd.s32 1, %s23
      %s33 = scalar_select %p30, %s32, %s23
      %p34 = scmp.ge.s32.totalorder %s33, 1
      %s35 = scalar_select %p34, 0, %s33
      %s36 = ssub.s32 %s23, %s35
      %s37 = ssub.s32 %s24, %s31
      %s38 = sor.u32 %s36, %s37
      %p39 = scmp.eq.s32.totalorder %s38, 0
      %s41 = sadd.s32 %s40, 1
      %s42 = scalar_select %p39, %s40, %s41
      %p45 = pneg %p39
      %p46 = scmp.eq.s32.totalorder %s16, 1
      %p47 = por %p45, %p46
      %p48 = scmp.ne.s32.totalorder %s40, %s43
      %p49 = scmp.eq.s32.totalorder %s16, 0
      %p50 = por %p48, %p49
      %p51 = scmp.ne.s32.totalorder %s40, %s43
      %p52 = scmp.eq.s32.totalorder %s21, 1
      %p53 = por %p51, %p52
      %p54 = scmp.ne.s32.totalorder %s43, %s44
      %p55 = scmp.eq.s32.totalorder %s21, 0
      %p56 = por %p54, %p55
      %p57 = scmp.ne.s32.totalorder %s43, %s44
      %p58 = scmp.eq.s32.totalorder %s22, 1
      %p59 = por %p57, %p58
      %p61 = scmp.ne.s32.totalorder %s44, %s60
      %p62 = scmp.eq.s32.totalorder %s22, 0
      %p63 = por %p61, %p62
      %s65 = sadd.s32 %s64, 1
      %p68 = scmp.eq.s32.totalorder %s16, 1
      %p69 = scmp.ne.s32.totalorder %s64, %s66
      %p70 = scmp.eq.s32.totalorder %s16, 0
      %p71 = por %p69, %p70
      %p72 = scmp.ne.s32.totalorder %s64, %s66
      %p73 = scmp.eq.s32.totalorder %s21, 1
      %p74 = por %p72, %p73
      %p75 = scmp.ne.s32.totalorder %s66, %s67
      %p76 = scmp.eq.s32.totalorder %s21, 0
      %p77 = por %p75, %p76
      %p78 = scmp.ne.s32.totalorder %s66, %s67
      %p79 = scmp.eq.s32.totalorder %s22, 1
      %p80 = por %p78, %p79
      %p82 = scmp.ne.s32.totalorder %s67, %s81
      %p83 = scmp.eq.s32.totalorder %s22, 0
      %p84 = por %p82, %p83
      %s86 = sadd.s32 %s85, 1
      %p89 = scmp.eq.s32.totalorder %s16, 1
      %p90 = scmp.ne.s32.totalorder %s85, %s87
      %p91 = scmp.eq.s32.totalorder %s16, 0
      %p92 = por %p90, %p91
      %p93 = scmp.ne.s32.totalorder %s85, %s87
      %p94 = scmp.eq.s32.totalorder %s21, 1
      %p95 = por %p93, %p94
      %p96 = scmp.ne.s32.totalorder %s87, %s88
      %p97 = scmp.eq.s32.totalorder %s21, 0
      %p98 = por %p96, %p97
      %p99 = scmp.ne.s32.totalorder %s87, %s88
      %p100 = scmp.eq.s32.totalorder %s22, 1
      %p101 = por %p99, %p100
      %p103 = scmp.ne.s32.totalorder %s88, %s102
      %p104 = scmp.eq.s32.totalorder %s22, 0
      %p105 = por %p103, %p104
      %s106 = ssub.s32 %s23, %s35
      %s107 = ssub.s32 %s24, %s31
      %s108 = sor.u32 %s106, %s107
      %p109 = scmp.eq.s32.totalorder %s108, 0
      %s111 = sadd.s32 %s110, 1
      %s112 = scalar_select %p109, %s110, %s111
      %p115 = pneg %p109
      %p116 = scmp.eq.s32.totalorder %s16, 1
      %p117 = por %p115, %p116
      %p118 = scmp.ne.s32.totalorder %s110, %s113
      %p119 = scmp.eq.s32.totalorder %s16, 0
      %p120 = por %p118, %p119
      %p121 = scmp.ne.s32.totalorder %s110, %s113
      %p122 = scmp.eq.s32.totalorder %s21, 1
      %p123 = por %p121, %p122
      %p124 = scmp.ne.s32.totalorder %s113, %s114
      %p125 = scmp.eq.s32.totalorder %s21, 0
      %p126 = por %p124, %p125
      %p127 = scmp.ne.s32.totalorder %s113, %s114
      %p128 = scmp.eq.s32.totalorder %s22, 1
      %p129 = por %p127, %p128
      %p131 = scmp.ne.s32.totalorder %s114, %s130
      %p132 = scmp.eq.s32.totalorder %s22, 0
      %p133 = por %p131, %p132
      %p134 = scmp.le.s32.totalorder 1, %s16
      %p135 = scmp.lt.s32.totalorder %s16, 3
      %p136 = pnand %p134, %p135
      %p137 = pneg %p136
      // Predicated region
      $region9: #{tpu_custom_call.1} parent=5 // pred_check
        _
      $region10: #{tpu_custom_call.1} parent=5 // pred_check_branch
        %139 = sbr.rel (%p136) target = $region12
      $region11: #{tpu_custom_call.1} parent=5 // pred_region
        %s140 = ssub.s32 %s16, 1
        // Predicated region
        $region13: #{tpu_custom_call.1} parent=11 // pred_check
          %p141 = pneg %p77
        $region14: #{tpu_custom_call.1} parent=11 // pred_check_branch
          %143 = sbr.rel (%p141) target = $region16
        $region15: #{tpu_custom_call.1} parent=11 // pred_region
          %s145 = ssub.s32 512, 512
          %146 = vsyncadd [#allocation8], %s145
          %s147 = sshll.u32 [#allocation7], 4
          %s148 = int_to_ptr.vmem [resolvable:$true] %s147
          %153 = dma.hbm_to_vmem [thread:$0]  %s1, 512, %s148, [#allocation8], 128, 128, 8
        $region16: #{tpu_custom_call.1} parent=11 // pred_fallthru
          _
        // Predicated region
        $region17: #{tpu_custom_call.1} parent=11 // pred_check
          %p154 = pneg %p98
        $region18: #{tpu_custom_call.1} parent=11 // pred_check_branch
          %156 = sbr.rel (%p154) target = $region20
        $region19: #{tpu_custom_call.1} parent=11 // pred_region
          _
        $region20: #{tpu_custom_call.1} parent=11 // pred_fallthru
          _
      $region12: #{tpu_custom_call.1} parent=5 // pred_fallthru
        _
      %p157 = scmp.lt.s32.totalorder %s16, 2
      // Predicated region
      $region21: #{tpu_custom_call.1} parent=5 // pred_check
        %p158 = pneg %p157
      $region22: #{tpu_custom_call.1} parent=5 // pred_check_branch
        %160 = sbr.rel (%p158) target = $region24
      $region23: #{tpu_custom_call.1} parent=5 // pred_region
        // Predicated region
        $region25: #{tpu_custom_call.1} parent=23 // pred_check
          %p161 = pneg %p50
        $region26: #{tpu_custom_call.1} parent=23 // pred_check_branch
          %163 = sbr.rel (%p161) target = $region28
        $region27: #{tpu_custom_call.1} parent=23 // pred_region
          %s164 = sand.u32 %s40, 1
          %s165 = scalar_lea.sflag [#allocation5], %s164
          %s166 = sand.u32 %s40, 1
          %s167 = smul.addr %s166, 16
          %s168 = scalar_lea.vmem [#allocation4], %s167
          %s169 = smul.u32 2, %s23
          %s171 = ssub.s32 256, 256
          %172 = vsyncadd %s165, %s171
          %s173 = smul.addr %s169, 2
          %s174 = sadd.s32 %s24, %s173
          %s175 = smul.addr %s174, 128
          %s176 = scalar_lea.hbm %s0, %s175
          %s177 = sshll.u32 %s168, 4
          %s178 = int_to_ptr.vmem [resolvable:$true] %s177
          %183 = dma.hbm_to_vmem [thread:$0]  %s176, 256, %s178, %s165, 256, 128, 8
        $region28: #{tpu_custom_call.1} parent=23 // pred_fallthru
          _
      $region24: #{tpu_custom_call.1} parent=5 // pred_fallthru
        _
      %p184 = scmp.le.s32.totalorder 1, %s16
      %p185 = scmp.lt.s32.totalorder %s16, 3
      %p186 = pnand %p184, %p185
      %p187 = pneg %p186
      // Predicated region
      $region29: #{tpu_custom_call.1} parent=5 // pred_check
        _
      $region30: #{tpu_custom_call.1} parent=5 // pred_check_branch
        %189 = sbr.rel (%p186) target = $region32
      $region31: #{tpu_custom_call.1} parent=5 // pred_region
        %s190 = ssub.s32 %s16, 1
        %s191 = sand.u32 %s43, 1
        %s192 = scalar_lea.sflag [#allocation5], %s191
        %s193 = sand.u32 %s43, 1
        %s194 = smul.addr %s193, 16
        %s195 = scalar_lea.vmem [#allocation4], %s194
        // Predicated region
        $region33: #{tpu_custom_call.1} parent=31 // pred_check
          %p196 = pneg %p56
        $region34: #{tpu_custom_call.1} parent=31 // pred_check_branch
          %198 = sbr.rel (%p196) target = $region36
        $region35: #{tpu_custom_call.1} parent=31 // pred_region
          %199 = dma.done %s192, 256
        $region36: #{tpu_custom_call.1} parent=31 // pred_fallthru
          _
        // Predicated region
        $region37: #{tpu_custom_call.1} parent=31 // pred_check
          %p200 = pneg %p77
        $region38: #{tpu_custom_call.1} parent=31 // pred_check_branch
          %202 = sbr.rel (%p200) target = $region40
        $region39: #{tpu_custom_call.1} parent=31 // pred_region
          %203 = dma.done [#allocation8], 512
        $region40: #{tpu_custom_call.1} parent=31 // pred_fallthru
          _
        %s204 = sand.u32 %s43, 1
        %s205 = scalar_lea.sflag [#allocation5], %s204
        %s206 = sand.u32 %s43, 1
        %s207 = smul.addr %s206, 16
        %s208 = scalar_lea.vmem [#allocation4], %s207
        %p209 = pneg %p56
        %p210 = pneg %p53
        %p211 = pneg %p77
        %p212 = pneg %p74
        %p213 = pneg %p98
        %p214 = pneg %p95
        %p215 = pneg %p126
        %p216 = pneg %p123
        %s217 = sand.u32 %s113, 1
        %s218 = scalar_lea.sflag [#allocation6], %s217
        %s219 = sand.u32 %s113, 1
        %s220 = smul.addr %s219, 16
        %s221 = scalar_lea.vmem [#allocation9], %s220
        %s222 = smul.u32 2, %s25
        %s223 = smul.u32 2, %s25
        %p224 = scmp.eq.s32.totalorder %s26, 0
        // Predicated region
        $region41: #{tpu_custom_call.1} parent=31 // pred_check
          %p225 = pneg %p224
        $region42: #{tpu_custom_call.1} parent=31 // pred_check_branch
          %227 = sbr.rel (%p225) target = $region44
        $region43: #{tpu_custom_call.1} parent=31 // pred_region
          %228 = vst [vmem:[#allocation2] sm:$0x3] 0.0
          %229 = vst [vmem:[#allocation3] sm:$0x3] 1.0
        $region44: #{tpu_custom_call.1} parent=31 // pred_fallthru
          _
        %v230 = vld [vmem:[%s195] sm:$0xff]
        %v231 = vld [vmem:[%s195 + $0x8] sm:$0xff]
        %v232 = vld [vmem:[#allocation7] sm:$0xff]
        %v233 = vld [vmem:[#allocation7 + $0x8] sm:$0xff]
        %v234 = vld [vmem:[#allocation7 + $0x10] sm:$0xff]
        %v235 = vld [vmem:[#allocation7 + $0x18] sm:$0xff]
        %v236 = vld [vmem:[%s2] sm:$0x1]
        %v238 = vlaneseq
        %v239 = vshrl.u32 %v238, 7
        %v240 = vsub.s32 0, %v239
        %v241 = vrot.slane %v236, %v240
        %vm243 = vcmask 261120
        %v245 = vsel %vm243, %v230, 0
        %v248 = vsel %vm243, %v231, 0
        %250 = vmatprep.subr.mxu0 0.0
        %251 = vmatpush1.msra.mxu0 %v232
        %252 = vmatprep.subr.mxu0 0.0
        %253 = vmatpush1.msra.mxu0 %v233
        %254 = vmatprep.subr.mxu0 0.0
        %255 = vmatpush1.msra.mxu0 %v234
        %256 = vmatprep.subr.mxu0 0.0
        %257 = vmatpush1.msra.mxu0 %v235
        %258 = vmatprep.subr.mxu0 0.0
        %259 = vmatpush1.msra.mxu0 0.0
        %260 = vmatprep.subr.mxu0 0.0
        %261 = vmatpush1.msra.mxu0 0.0
        %262 = vmatprep.subr.mxu0 0.0
        %263 = vmatpush1.msra.mxu0 0.0
        %264 = vmatprep.subr.mxu0 0.0
        %265 = vmatpush1.msra.mxu0 0.0
        %266 = vmatprep.subr.mxu0 0.0
        %267 = vmatpush1.msra.mxu0 0.0
        %268 = vmatprep.subr.mxu0 0.0
        %269 = vmatpush1.msra.mxu0 0.0
        %270 = vmatprep.subr.mxu0 0.0
        %271 = vmatpush1.msra.mxu0 0.0
        %272 = vmatprep.subr.mxu0 0.0
        %273 = vmatpush1.msra.mxu0 0.0
        %274 = vmatprep.subr.mxu0 0.0
        %275 = vmatpush1.msra.mxu0 0.0
        %276 = vmatprep.subr.mxu0 0.0
        %277 = vmatpush1.msra.mxu0 0.0
        %278 = vmatprep.subr.mxu0 0.0
        %279 = vmatpush1.msra.mxu0 0.0
        %280 = vmatprep.subr.mxu0 0.0
        %281 = vmatpush1.msra.mxu0 0.0
        %282 = vmatprep.subr.mxu0 0.0
        %283 = vmatpush1.msra.mxu0 0.0
        %284 = vmatprep.subr.mxu0 0.0
        %285 = vmatpush1.msra.mxu0 0.0
        %286 = vmatprep.subr.mxu0 0.0
        %287 = vmatpush1.msra.mxu0 0.0
        %288 = vmatprep.subr.mxu0 0.0
        %289 = vmatpush1.msra.mxu0 0.0
        %290 = vmatprep.subr.mxu0 0.0
        %291 = vmatpush1.msra.mxu0 0.0
        %292 = vmatprep.subr.mxu0 0.0
        %293 = vmatpush1.msra.mxu0 0.0
        %294 = vmatprep.subr.mxu0 0.0
        %295 = vmatpush1.msra.mxu0 0.0
        %296 = vmatprep.subr.mxu0 0.0
        %297 = vmatpush1.msra.mxu0 0.0
        %298 = vmatprep.subr.mxu0 0.0
        %299 = vmatpush1.msra.mxu0 0.0
        %300 = vmatprep.subr.mxu0 0.0
        %301 = vmatpush1.msra.mxu0 0.0
        %302 = vmatprep.subr.mxu0 0.0
        %303 = vmatpush1.msra.mxu0 0.0
        %304 = vmatprep.subr.mxu0 0.0
        %305 = vmatpush1.msra.mxu0 0.0
        %306 = vmatprep.subr.mxu0 0.0
        %307 = vmatpush1.msra.mxu0 0.0
        %308 = vmatprep.subr.mxu0 0.0
        %309 = vmatpush1.msra.mxu0 0.0
        %310 = vmatprep.subr.mxu0 0.0
        %311 = vmatpush1.msra.mxu0 0.0
        %312 = vmatprep.subr.mxu0 0.0
        %313 = vmatpush1.msra.mxu0 0.0
        %314 = vmatprep.mubr.f32.mxu0 0.0
        %315 = vmatmul.mubr.f32.gmra.mrb[0].mxu0 %v245
        %v316 = vpop.f32.mrb[0].mxu0
        %v317 = vadd.f32 %v241, %v316
        %v318 = vpop.f32.mrb[0].mxu0
        %319 = vmatprep.mubr.f32.mxu0 0.0
        %320 = vmatmul.mubr.f32.gmra.mrb[0].mxu0 %v248
        %v321 = vpop.f32.mrb[0].mxu0
        %v322 = vadd.f32 %v241, %v321
        %v323 = vpop.f32.mrb[0].mxu0
        %324 = vdwg.mxu0
        %v325 = vlaneseq
        %v326 = vand.u32 %v325, 127
        %vm327 = vcmp.lt.s32.totalorder %v326, 32
        %v328 = vsel %vm327, 0.1, 0.0
        %v329 = vld [vmem:[#allocation2] sm:$0x3]
        %v330 = vld [vmem:[#allocation3] sm:$0x3]
        %v331 = vmul.f32 %v329, %v328
        %vm332 = vcmask 1041408
        %v333 = vsel %vm332, %v331, 0.0
        %334 = vadd.xlane.f32.xlu0 %v333
        %v335 = vpop.xlane.xlu0 %334
        %v336 = vmul.f32 %v329, 0.9
        %v338 = vrot.slane %v335, 1
        %v341 = vsub.f32 %v317, %v335
        %v342 = vsub.f32 %v322, %v338
        %v345 = vrot.slane %v342, 7
        %vm346 = vcmask 1041409
        %v347 = vsel %vm346, %v345, %v341
        %v349 = vadd.f32 %v336, %v347
        %vm350 = vcmp.ge.f32.partialorder %v349, %v330
        %v351 = vsel %vm350, 1, 0
        %v352 = vcvt.s32.f32 %v351
        %v353 = vmul.f32 %v352, %v330
        %v354 = vsub.f32 %v349, %v353
        %v355 = vmul.f32 %v330, 0.9
        %v356 = vmul.f32 %v352, 0.1
        %v357 = vadd.f32 %v355, %v356
        %v360 = vunpack.c.l.s4 1966171168
        %v361 = vunpack.c.0.s8 %v360
        %v362 = vlaneseq
        %v363 = vshrl.u32 %v362, 7
        %v364 = vsub.s32 %v361, %v363
        %v365 = vrot.slane %v352, %v364
        %v366 = vcombine.high %v365, %v365
        %v368 = vunpack.c.l.s4 1966171168
        %v369 = vunpack.c.0.s8 %v368
        %v370 = vlaneseq
        %v371 = vshrl.u32 %v370, 7
        %v372 = vsub.s32 %v369, %v371
        %v373 = vrot.slane %v365, %v372
        %v375 = vunpack.c.l.s4 1966171168
        %v376 = vunpack.c.0.s8 %v375
        %v377 = vlaneseq
        %v378 = vshrl.u32 %v377, 7
        %v379 = vsub.s32 %v376, %v378
        %v380 = vrot.slane %v366, %v379
        %383 = vst [vmem:[%s221] sm:$0x1] %v373
        %384 = vst [vmem:[%s221 + $0x8] sm:$0x1] %v380
        %v385 = vmul.f32 %v354, %v328
        %v386 = vsel %vm332, %v385, 0.0
        %387 = vadd.xlane.f32.xlu0 %v386
        %v388 = vpop.xlane.xlu0 %387
        %v389 = vmul.f32 %v354, 0.9
        %v391 = vrot.slane %v388, 7
        %v394 = vsub.f32 %v317, %v391
        %v395 = vsub.f32 %v322, %v388
        %v398 = vrot.slane %v394, 1
        %v399 = vsel %vm346, %v395, %v398
        %v401 = vadd.f32 %v389, %v399
        %vm402 = vcmp.ge.f32.partialorder %v401, %v357
        %v403 = vsel %vm402, 1, 0
        %v404 = vcvt.s32.f32 %v403
        %v405 = vmul.f32 %v404, %v357
        %v406 = vsub.f32 %v401, %v405
        %v407 = vmul.f32 %v357, 0.9
        %v408 = vmul.f32 %v404, 0.1
        %v409 = vadd.f32 %v407, %v408
        %v412 = vunpack.c.l.s4 1966171168
        %v413 = vunpack.c.0.s8 %v412
        %v414 = vlaneseq
        %v415 = vshrl.u32 %v414, 7
        %v416 = vsub.s32 %v413, %v415
        %v417 = vrot.slane %v404, %v416
        %v418 = vcombine.high %v417, %v417
        %v420 = vunpack.c.l.s4 1966171168
        %v421 = vunpack.c.0.s8 %v420
        %v422 = vlaneseq
        %v423 = vshrl.u32 %v422, 7
        %v424 = vsub.s32 %v421, %v423
        %v425 = vrot.slane %v417, %v424
        %v427 = vunpack.c.l.s4 1966171168
        %v428 = vunpack.c.0.s8 %v427
        %v429 = vlaneseq
        %v430 = vshrl.u32 %v429, 7
        %v431 = vsub.s32 %v428, %v430
        %v432 = vrot.slane %v418, %v431
        %435 = vst [vmem:[%s221 + $0x1] sm:$0x1] %v425
        %436 = vst [vmem:[%s221 + $0x9] sm:$0x1] %v432
        %v437 = vmul.f32 %v406, %v328
        %v438 = vsel %vm332, %v437, 0.0
        %439 = vadd.xlane.f32.xlu0 %v438
        %v440 = vpop.xlane.xlu0 %439
        %v441 = vmul.f32 %v406, 0.9
        %v443 = vrot.slane %v440, 6
        %v444 = vrot.slane %v440, 7
        %v447 = vsub.f32 %v317, %v443
        %v448 = vsub.f32 %v322, %v444
        %v451 = vrot.slane %v447, 2
        %v452 = vrot.slane %v448, 1
        %v453 = vsel %vm346, %v452, %v451
        %v455 = vadd.f32 %v441, %v453
        %vm456 = vcmp.ge.f32.partialorder %v455, %v409
        %v457 = vsel %vm456, 1, 0
        %v458 = vcvt.s32.f32 %v457
        %v459 = vmul.f32 %v458, %v409
        %v460 = vsub.f32 %v455, %v459
        %v461 = vmul.f32 %v409, 0.9
        %v462 = vmul.f32 %v458, 0.1
        %v463 = vadd.f32 %v461, %v462
        %v466 = vunpack.c.l.s4 1966171168
        %v467 = vunpack.c.0.s8 %v466
        %v468 = vlaneseq
        %v469 = vshrl.u32 %v468, 7
        %v470 = vsub.s32 %v467, %v469
        %v471 = vrot.slane %v458, %v470
        %v472 = vcombine.high %v471, %v471
        %v474 = vunpack.c.l.s4 1966171168
        %v475 = vunpack.c.0.s8 %v474
        %v476 = vlaneseq
        %v477 = vshrl.u32 %v476, 7
        %v478 = vsub.s32 %v475, %v477
        %v479 = vrot.slane %v471, %v478
        %v481 = vunpack.c.l.s4 1966171168
        %v482 = vunpack.c.0.s8 %v481
        %v483 = vlaneseq
        %v484 = vshrl.u32 %v483, 7
        %v485 = vsub.s32 %v482, %v484
        %v486 = vrot.slane %v472, %v485
        %489 = vst [vmem:[%s221 + $0x2] sm:$0x1] %v479
        %490 = vst [vmem:[%s221 + $0xa] sm:$0x1] %v486
        %v491 = vmul.f32 %v460, %v328
        %v492 = vsel %vm332, %v491, 0.0
        %493 = vadd.xlane.f32.xlu0 %v492
        %v494 = vpop.xlane.xlu0 %493
        %v495 = vmul.f32 %v460, 0.9
        %v497 = vrot.slane %v494, 5
        %v498 = vrot.slane %v494, 6
        %v501 = vsub.f32 %v317, %v497
        %v502 = vsub.f32 %v322, %v498
        %v505 = vrot.slane %v501, 3
        %v506 = vrot.slane %v502, 2
        %v507 = vsel %vm346, %v506, %v505
        %v509 = vadd.f32 %v495, %v507
        %vm510 = vcmp.ge.f32.partialorder %v509, %v463
        %v511 = vsel %vm510, 1, 0
        %v512 = vcvt.s32.f32 %v511
        %v513 = vmul.f32 %v512, %v463
        %v514 = vsub.f32 %v509, %v513
        %v515 = vmul.f32 %v463, 0.9
        %v516 = vmul.f32 %v512, 0.1
        %v517 = vadd.f32 %v515, %v516
        %v520 = vunpack.c.l.s4 1966171168
        %v521 = vunpack.c.0.s8 %v520
        %v522 = vlaneseq
        %v523 = vshrl.u32 %v522, 7
        %v524 = vsub.s32 %v521, %v523
        %v525 = vrot.slane %v512, %v524
        %v526 = vcombine.high %v525, %v525
        %v528 = vunpack.c.l.s4 1966171168
        %v529 = vunpack.c.0.s8 %v528
        %v530 = vlaneseq
        %v531 = vshrl.u32 %v530, 7
        %v532 = vsub.s32 %v529, %v531
        %v533 = vrot.slane %v525, %v532
        %v535 = vunpack.c.l.s4 1966171168
        %v536 = vunpack.c.0.s8 %v535
        %v537 = vlaneseq
        %v538 = vshrl.u32 %v537, 7
        %v539 = vsub.s32 %v536, %v538
        %v540 = vrot.slane %v526, %v539
        %543 = vst [vmem:[%s221 + $0x3] sm:$0x1] %v533
        %544 = vst [vmem:[%s221 + $0xb] sm:$0x1] %v540
        %v545 = vmul.f32 %v514, %v328
        %v546 = vsel %vm332, %v545, 0.0
        %547 = vadd.xlane.f32.xlu0 %v546
        %v548 = vpop.xlane.xlu0 %547
        %v549 = vmul.f32 %v514, 0.9
        %v551 = vrot.slane %v548, 4
        %v552 = vrot.slane %v548, 5
        %v555 = vsub.f32 %v317, %v551
        %v556 = vsub.f32 %v322, %v552
        %v559 = vrot.slane %v555, 4
        %v560 = vrot.slane %v556, 3
        %v561 = vsel %vm346, %v560, %v559
        %v563 = vadd.f32 %v549, %v561
        %vm564 = vcmp.ge.f32.partialorder %v563, %v517
        %v565 = vsel %vm564, 1, 0
        %v566 = vcvt.s32.f32 %v565
        %v567 = vmul.f32 %v566, %v517
        %v568 = vsub.f32 %v563, %v567
        %v569 = vmul.f32 %v517, 0.9
        %v570 = vmul.f32 %v566, 0.1
        %v571 = vadd.f32 %v569, %v570
        %v574 = vunpack.c.l.s4 1966171168
        %v575 = vunpack.c.0.s8 %v574
        %v576 = vlaneseq
        %v577 = vshrl.u32 %v576, 7
        %v578 = vsub.s32 %v575, %v577
        %v579 = vrot.slane %v566, %v578
        %v580 = vcombine.high %v579, %v579
        %v582 = vunpack.c.l.s4 1966171168
        %v583 = vunpack.c.0.s8 %v582
        %v584 = vlaneseq
        %v585 = vshrl.u32 %v584, 7
        %v586 = vsub.s32 %v583, %v585
        %v587 = vrot.slane %v579, %v586
        %v589 = vunpack.c.l.s4 1966171168
        %v590 = vunpack.c.0.s8 %v589
        %v591 = vlaneseq
        %v592 = vshrl.u32 %v591, 7
        %v593 = vsub.s32 %v590, %v592
        %v594 = vrot.slane %v580, %v593
        %597 = vst [vmem:[%s221 + $0x4] sm:$0x1] %v587
        %598 = vst [vmem:[%s221 + $0xc] sm:$0x1] %v594
        %v599 = vmul.f32 %v568, %v328
        %v600 = vsel %vm332, %v599, 0.0
        %601 = vadd.xlane.f32.xlu0 %v600
        %v602 = vpop.xlane.xlu0 %601
        %v603 = vmul.f32 %v568, 0.9
        %v605 = vrot.slane %v602, 3
        %v606 = vrot.slane %v602, 4
        %v609 = vsub.f32 %v317, %v605
        %v610 = vsub.f32 %v322, %v606
        %v613 = vrot.slane %v609, 5
        %v614 = vrot.slane %v610, 4
        %v615 = vsel %vm346, %v614, %v613
        %v617 = vadd.f32 %v603, %v615
        %vm618 = vcmp.ge.f32.partialorder %v617, %v571
        %v619 = vsel %vm618, 1, 0
        %v620 = vcvt.s32.f32 %v619
        %v621 = vmul.f32 %v620, %v571
        %v622 = vsub.f32 %v617, %v621
        %v623 = vmul.f32 %v571, 0.9
        %v624 = vmul.f32 %v620, 0.1
        %v625 = vadd.f32 %v623, %v624
        %v628 = vunpack.c.l.s4 1966171168
        %v629 = vunpack.c.0.s8 %v628
        %v630 = vlaneseq
        %v631 = vshrl.u32 %v630, 7
        %v632 = vsub.s32 %v629, %v631
        %v633 = vrot.slane %v620, %v632
        %v634 = vcombine.high %v633, %v633
        %v636 = vunpack.c.l.s4 1966171168
        %v637 = vunpack.c.0.s8 %v636
        %v638 = vlaneseq
        %v639 = vshrl.u32 %v638, 7
        %v640 = vsub.s32 %v637, %v639
        %v641 = vrot.slane %v633, %v640
        %v643 = vunpack.c.l.s4 1966171168
        %v644 = vunpack.c.0.s8 %v643
        %v645 = vlaneseq
        %v646 = vshrl.u32 %v645, 7
        %v647 = vsub.s32 %v644, %v646
        %v648 = vrot.slane %v634, %v647
        %651 = vst [vmem:[%s221 + $0x5] sm:$0x1] %v641
        %652 = vst [vmem:[%s221 + $0xd] sm:$0x1] %v648
        %v653 = vmul.f32 %v622, %v328
        %v654 = vsel %vm332, %v653, 0.0
        %655 = vadd.xlane.f32.xlu0 %v654
        %v656 = vpop.xlane.xlu0 %655
        %v657 = vmul.f32 %v622, 0.9
        %v659 = vrot.slane %v656, 2
        %v660 = vrot.slane %v656, 3
        %v663 = vsub.f32 %v317, %v659
        %v664 = vsub.f32 %v322, %v660
        %v667 = vrot.slane %v663, 6
        %v668 = vrot.slane %v664, 5
        %v669 = vsel %vm346, %v668, %v667
        %v671 = vadd.f32 %v657, %v669
        %vm672 = vcmp.ge.f32.partialorder %v671, %v625
        %v673 = vsel %vm672, 1, 0
        %v674 = vcvt.s32.f32 %v673
        %v675 = vmul.f32 %v674, %v625
        %v676 = vsub.f32 %v671, %v675
        %v677 = vmul.f32 %v625, 0.9
        %v678 = vmul.f32 %v674, 0.1
        %v679 = vadd.f32 %v677, %v678
        %v682 = vunpack.c.l.s4 1966171168
        %v683 = vunpack.c.0.s8 %v682
        %v684 = vlaneseq
        %v685 = vshrl.u32 %v684, 7
        %v686 = vsub.s32 %v683, %v685
        %v687 = vrot.slane %v674, %v686
        %v688 = vcombine.high %v687, %v687
        %v690 = vunpack.c.l.s4 1966171168
        %v691 = vunpack.c.0.s8 %v690
        %v692 = vlaneseq
        %v693 = vshrl.u32 %v692, 7
        %v694 = vsub.s32 %v691, %v693
        %v695 = vrot.slane %v687, %v694
        %v697 = vunpack.c.l.s4 1966171168
        %v698 = vunpack.c.0.s8 %v697
        %v699 = vlaneseq
        %v700 = vshrl.u32 %v699, 7
        %v701 = vsub.s32 %v698, %v700
        %v702 = vrot.slane %v688, %v701
        %705 = vst [vmem:[%s221 + $0x6] sm:$0x1] %v695
        %706 = vst [vmem:[%s221 + $0xe] sm:$0x1] %v702
        %v707 = vmul.f32 %v676, %v328
        %v708 = vsel %vm332, %v707, 0.0
        %709 = vadd.xlane.f32.xlu0 %v708
        %v710 = vpop.xlane.xlu0 %709
        %v711 = vmul.f32 %v676, 0.9
        %v713 = vrot.slane %v710, 1
        %v714 = vrot.slane %v710, 2
        %v717 = vsub.f32 %v317, %v713
        %v718 = vsub.f32 %v322, %v714
        %v721 = vrot.slane %v717, 7
        %v722 = vrot.slane %v718, 6
        %v723 = vsel %vm346, %v722, %v721
        %v725 = vadd.f32 %v711, %v723
        %vm726 = vcmp.ge.f32.partialorder %v725, %v679
        %v727 = vsel %vm726, 1, 0
        %v728 = vcvt.s32.f32 %v727
        %v729 = vmul.f32 %v728, %v679
        %v730 = vsub.f32 %v725, %v729
        %v731 = vmul.f32 %v679, 0.9
        %v732 = vmul.f32 %v728, 0.1
        %v733 = vadd.f32 %v731, %v732
        %v736 = vunpack.c.l.s4 1966171168
        %v737 = vunpack.c.0.s8 %v736
        %v738 = vlaneseq
        %v739 = vshrl.u32 %v738, 7
        %v740 = vsub.s32 %v737, %v739
        %v741 = vrot.slane %v728, %v740
        %v742 = vcombine.high %v741, %v741
        %v744 = vunpack.c.l.s4 1966171168
        %v745 = vunpack.c.0.s8 %v744
        %v746 = vlaneseq
        %v747 = vshrl.u32 %v746, 7
        %v748 = vsub.s32 %v745, %v747
        %v749 = vrot.slane %v741, %v748
        %v751 = vunpack.c.l.s4 1966171168
        %v752 = vunpack.c.0.s8 %v751
        %v753 = vlaneseq
        %v754 = vshrl.u32 %v753, 7
        %v755 = vsub.s32 %v752, %v754
        %v756 = vrot.slane %v742, %v755
        %759 = vst [vmem:[%s221 + $0x7] sm:$0x1] %v749
        %760 = vst [vmem:[%s221 + $0xf] sm:$0x1] %v756
        %761 = vst [vmem:[#allocation2] sm:$0x3] %v730
        %762 = vst [vmem:[#allocation3] sm:$0x3] %v733
        %s763 = sand.u32 %s113, 1
        %s764 = scalar_lea.sflag [#allocation6], %s763
        %s765 = sand.u32 %s113, 1
        %s766 = smul.addr %s765, 16
        %s767 = scalar_lea.vmem [#allocation9], %s766
        // Predicated region
        $region45: #{tpu_custom_call.1} parent=31 // pred_check
          %p768 = pneg %p123
        $region46: #{tpu_custom_call.1} parent=31 // pred_check_branch
          %770 = sbr.rel (%p768) target = $region48
        $region47: #{tpu_custom_call.1} parent=31 // pred_region
          %s771 = smul.u32 2, %s25
          %s773 = ssub.s32 256, 256
          %774 = vsyncadd %s764, %s773
          %s775 = smul.addr %s771, 2
          %s776 = sadd.s32 %s26, %s775
          %s777 = smul.addr %s776, 128
          %s778 = scalar_lea.hbm %s3, %s777
          %s779 = sshll.u32 %s767, 4
          %s780 = int_to_ptr.vmem [resolvable:$true] %s779
          %785 = dma.vmem_to_hbm [thread:$0]  %s780, 256, %s778, %s764, 128, 256, 8
        $region48: #{tpu_custom_call.1} parent=31 // pred_fallthru
          _
      $region32: #{tpu_custom_call.1} parent=5 // pred_fallthru
        _
      %p786 = scmp.le.s32.totalorder 2, %s16
      // Predicated region
      $region49: #{tpu_custom_call.1} parent=5 // pred_check
        %p787 = pneg %p786
      $region50: #{tpu_custom_call.1} parent=5 // pred_check_branch
        %789 = sbr.rel (%p787) target = $region52
      $region51: #{tpu_custom_call.1} parent=5 // pred_region
        %s790 = ssub.s32 %s16, 2
        // Predicated region
        $region53: #{tpu_custom_call.1} parent=51 // pred_check
          %p791 = pneg %p129
        $region54: #{tpu_custom_call.1} parent=51 // pred_check_branch
          %793 = sbr.rel (%p791) target = $region56
        $region55: #{tpu_custom_call.1} parent=51 // pred_region
          %s794 = sand.u32 %s114, 1
          %s795 = scalar_lea.sflag [#allocation6], %s794
          %s796 = sand.u32 %s114, 1
          %s797 = smul.addr %s796, 16
          %s798 = scalar_lea.vmem [#allocation9], %s797
          %799 = dma.done %s795, 256
        $region56: #{tpu_custom_call.1} parent=51 // pred_fallthru
          _
      $region52: #{tpu_custom_call.1} parent=5 // pred_fallthru
        _
    $region6: #{tpu_custom_call.1} parent=1 // loop_footer
      %s20 = sadd.s32 1, %s16
    $region7: #{tpu_custom_call.1} parent=1 // loop_footer_branch
      %15 = sbr.rel target = $region3
    $region8: #{tpu_custom_call.1} parent=1 // loop_exit
      _
    %800 = vsyncpa [#allocation5], 1
    %s801 = scalar_lea.sflag [#allocation5], 1
    %802 = vsyncpa %s801, 1
    %803 = vsyncpa [#allocation8], 1
    %804 = vsyncpa [#allocation6], 1
    %s805 = scalar_lea.sflag [#allocation6], 1
    %806 = vsyncpa %s805, 1

</llo_original>
